<compile_context>
chip_gen: v7x
topology: tpu7x:2x2x1
jax: 0.10.0
libtpu: 0.0.40
codegen_flags: <defaults>
</compile_context>

<pallas_src>
import jax
import jax.numpy as jnp
from jax.experimental import pallas as pl
from jax.experimental.pallas import tpu as pltpu


def _round_up(v, m):
    return (v + m - 1) // m * m


def sae_kernel(x_ref, w_enc_ref, b_enc_ref, w_dec_ref, b_dec_ref,
               rec_ref, hid_ref):
    # Encoder: (TB, Dp) @ (Dp, Hp) bf16 on the MXU, f32 accumulation;
    # bias add + ReLU in f32 on the VPU.
    h = jnp.dot(x_ref[...], w_enc_ref[...],
                preferred_element_type=jnp.float32) + b_enc_ref[...]
    h = jnp.maximum(h, 0.0)
    hid_ref[...] = h.astype(hid_ref.dtype)

    # Decoder: (TB, Hp) @ (Hp, Dp); feed the MXU in bf16, accumulate in f32.
    rec = jnp.dot(h.astype(w_dec_ref.dtype), w_dec_ref[...],
                  preferred_element_type=jnp.float32) + b_dec_ref[...]
    rec_ref[...] = rec.astype(rec_ref.dtype)


def sparse_autoencoder_forward(x, w_enc, b_enc, w_dec, b_dec, *, block_batch=256):
    """x: (B, input_dim) f32. w_enc: (input_dim, hidden_dim). w_dec: (hidden_dim, input_dim).
    Returns (reconstruction (B, input_dim) f32, hidden (B, hidden_dim) f32)."""
    B, input_dim = x.shape
    hidden_dim = w_enc.shape[1]

    # Lane-dense padded feature dims (multiples of 128).
    Dp = _round_up(input_dim, 128)
    Hp = _round_up(hidden_dim, 128)
    # bf16 activations pack 16 rows per sublane tile -> batch tile multiple of 16
    # (also satisfies the f32 output tiles' multiple-of-8 sublane requirement).
    TB = min(_round_up(block_batch, 16), _round_up(B, 16))
    Bp = _round_up(B, TB)

    xp = jnp.zeros((Bp, Dp), jnp.bfloat16).at[:B, :input_dim].set(
        x.astype(jnp.bfloat16))
    w_enc_p = jnp.zeros((Dp, Hp), jnp.bfloat16).at[:input_dim, :hidden_dim].set(
        w_enc.astype(jnp.bfloat16))
    w_dec_p = jnp.zeros((Hp, Dp), jnp.bfloat16).at[:hidden_dim, :input_dim].set(
        w_dec.astype(jnp.bfloat16))
    b_enc_p = jnp.zeros((1, Hp), jnp.float32).at[0, :hidden_dim].set(
        b_enc.astype(jnp.float32))
    b_dec_p = jnp.zeros((1, Dp), jnp.float32).at[0, :input_dim].set(
        b_dec.astype(jnp.float32))

    grid = (Bp // TB,)

    # VMEM budget: resident bf16 weights + f32 biases + double-buffered tiles
    # of x (bf16), reconstruction (f32) and hidden (f32), plus slack.
    weights_bytes = (Dp * Hp + Hp * Dp) * 2 + (Hp + Dp) * 4
    tile_bytes = TB * Dp * 2 + TB * Dp * 4 + TB * Hp * 4
    vmem_limit = min(max(2 * weights_bytes + 4 * tile_bytes + (4 << 20),
                         32 * 1024 * 1024),
                     60 * 1024 * 1024)

    cost = pl.CostEstimate(
        flops=2 * Bp * (Dp * Hp + Hp * Dp),
        transcendentals=0,
        bytes_accessed=Bp * Dp * 2 + weights_bytes + Bp * Dp * 4 + Bp * Hp * 4,
    )

    rec, hid = pl.pallas_call(
        sae_kernel,
        out_shape=(
            jax.ShapeDtypeStruct((Bp, Dp), jnp.float32),   # reconstruction
            jax.ShapeDtypeStruct((Bp, Hp), jnp.float32),   # hidden
        ),
        grid=grid,
        in_specs=[
            pl.BlockSpec((TB, Dp), lambda i: (i, 0)),   # x tile (pipelined)
            pl.BlockSpec((Dp, Hp), lambda i: (0, 0)),   # W_enc (resident)
            pl.BlockSpec((1, Hp), lambda i: (0, 0)),    # b_enc (resident)
            pl.BlockSpec((Hp, Dp), lambda i: (0, 0)),   # W_dec (resident)
            pl.BlockSpec((1, Dp), lambda i: (0, 0)),    # b_dec (resident)
        ],
        out_specs=(
            pl.BlockSpec((TB, Dp), lambda i: (i, 0)),   # reconstruction tile
            pl.BlockSpec((TB, Hp), lambda i: (i, 0)),   # hidden tile
        ),
        compiler_params=pltpu.CompilerParams(
            dimension_semantics=("parallel",),
            vmem_limit_bytes=vmem_limit,
        ),
        cost_estimate=cost,
    )(xp, w_enc_p, b_enc_p, w_dec_p, b_dec_p)

    # TODO(synk): for very large input_dim*hidden_dim (weights exceeding VMEM on
    # v7x's 64 MiB) add a second "arbitrary" grid axis over feature-dim chunks
    # with an f32 accumulator scratch instead of keeping weights fully resident.
    return rec[:B, :input_dim], hid[:B, :hidden_dim]


def reference_forward(x, w_enc, b_enc, w_dec, b_dec):
    h = jnp.maximum(x @ w_enc + b_enc, 0.0)
    return h @ w_dec + b_dec, h


if __name__ == "__main__":
    # Small shapes consistent with the module: batch=8, input_dim=64, hidden_dim=32.
    B, INPUT_DIM, HIDDEN_DIM = 8, 64, 32

    key = jax.random.PRNGKey(0)
    kx, k1, k2, k3, k4 = jax.random.split(key, 5)

    x = jax.random.normal(kx, (B, INPUT_DIM), dtype=jnp.float32)

    # Deterministic parameter init (PyTorch-Linear-like uniform bounds), stored
    # pre-transposed as (in, out) for the kernel's x @ W layout.
    bound_enc = 1.0 / (INPUT_DIM ** 0.5)
    w_enc = jax.random.uniform(k1, (INPUT_DIM, HIDDEN_DIM), jnp.float32,
                               -bound_enc, bound_enc)
    b_enc = jax.random.uniform(k2, (HIDDEN_DIM,), jnp.float32,
                               -bound_enc, bound_enc)

    bound_dec = 1.0 / (HIDDEN_DIM ** 0.5)
    w_dec = jax.random.uniform(k3, (HIDDEN_DIM, INPUT_DIM), jnp.float32,
                               -bound_dec, bound_dec)
    b_dec = jax.random.uniform(k4, (INPUT_DIM,), jnp.float32,
                               -bound_dec, bound_dec)

    rec, hid = sparse_autoencoder_forward(x, w_enc, b_enc, w_dec, b_dec)
    jax.block_until_ready((rec, hid))

    rec_ref, hid_ref = reference_forward(x, w_enc, b_enc, w_dec, b_dec)
    assert rec.shape == (B, INPUT_DIM) and hid.shape == (B, HIDDEN_DIM)
    # bf16 MXU inputs with f32 accumulation -> loosened tolerance vs f32 reference.
    assert jnp.allclose(rec, rec_ref, atol=5e-2, rtol=5e-2), (
        float(jnp.max(jnp.abs(rec - rec_ref))))
    assert jnp.allclose(hid, hid_ref, atol=5e-2, rtol=5e-2), (
        float(jnp.max(jnp.abs(hid - hid_ref))))

    print("KERNEL_OK")
</pallas_src>

<mosaic_0001>
module attributes {stable_mosaic.version = 11 : i64} {
  func.func @sae_kernel(%arg0: i32, %arg1: memref<16x128xbf16, #tpu.memory_space<vmem>>, %arg2: memref<128x128xbf16, #tpu.memory_space<vmem>>, %arg3: memref<1x128xf32, #tpu.memory_space<vmem>>, %arg4: memref<128x128xbf16, #tpu.memory_space<vmem>>, %arg5: memref<1x128xf32, #tpu.memory_space<vmem>>, %arg6: memref<16x128xf32, #tpu.memory_space<vmem>>, %arg7: memref<16x128xf32, #tpu.memory_space<vmem>>) attributes {dimension_semantics = [#tpu.dimension_semantics<parallel>], iteration_bounds = array<i64: 1>, scalar_prefetch = 0 : i64, scratch_operands = 0 : i64, tpu.core_type = #tpu.core_type<tc>, window_params = [{transform_indices = @transform_0, window_bounds = array<i64: 16, 128>}, {pipeline_mode = #tpu.pipeline_mode<synchronous>, transform_indices = @transform_1, window_bounds = array<i64: 128, 128>}, {pipeline_mode = #tpu.pipeline_mode<synchronous>, transform_indices = @transform_2, window_bounds = array<i64: 1, 128>}, {pipeline_mode = #tpu.pipeline_mode<synchronous>, transform_indices = @transform_3, window_bounds = array<i64: 128, 128>}, {pipeline_mode = #tpu.pipeline_mode<synchronous>, transform_indices = @transform_4, window_bounds = array<i64: 1, 128>}, {transform_indices = @transform_5, window_bounds = array<i64: 16, 128>}, {transform_indices = @transform_6, window_bounds = array<i64: 16, 128>}]} {
    %c0 = arith.constant 0 : index
    %c0_0 = arith.constant 0 : index
    %0 = vector.load %arg1[%c0, %c0_0] : memref<16x128xbf16, #tpu.memory_space<vmem>>, vector<16x128xbf16>
    %c0_1 = arith.constant 0 : index
    %c0_2 = arith.constant 0 : index
    %1 = vector.load %arg2[%c0_1, %c0_2] : memref<128x128xbf16, #tpu.memory_space<vmem>>, vector<128x128xbf16>
    %cst = arith.constant dense<0.000000e+00> : vector<16x128xf32>
    %2 = tpu.matmul %0, %1, %cst {dimension_numbers = #tpu.dot_dimension_numbers<[1], [0], [0], [1], [0, 0, 1, 1], [], []>} : vector<16x128xbf16>, vector<128x128xbf16>, vector<16x128xf32> -> vector<16x128xf32>
    %c0_3 = arith.constant 0 : index
    %c0_4 = arith.constant 0 : index
    %3 = vector.load %arg3[%c0_3, %c0_4] : memref<1x128xf32, #tpu.memory_space<vmem>>, vector<1x128xf32>
    %4 = vector.broadcast %3 : vector<1x128xf32> to vector<16x128xf32>
    %5 = arith.addf %2, %4 : vector<16x128xf32>
    %cst_5 = arith.constant 0.000000e+00 : f32
    %6 = vector.broadcast %cst_5 : f32 to vector<16x128xf32>
    %7 = arith.maximumf %5, %6 : vector<16x128xf32>
    %c0_6 = arith.constant 0 : index
    %c0_7 = arith.constant 0 : index
    %8 = vector.load %arg7[%c0_6, %c0_7] : memref<16x128xf32, #tpu.memory_space<vmem>>, vector<16x128xf32>
    tpu.vector_store %arg7[%c0_6, %c0_7], %7 {strides = array<i32>} : memref<16x128xf32, #tpu.memory_space<vmem>>, vector<16x128xf32>,
    %9 = arith.truncf %7 : vector<16x128xf32> to vector<16x128xbf16>
    %c0_8 = arith.constant 0 : index
    %c0_9 = arith.constant 0 : index
    %10 = vector.load %arg4[%c0_8, %c0_9] : memref<128x128xbf16, #tpu.memory_space<vmem>>, vector<128x128xbf16>
    %cst_10 = arith.constant dense<0.000000e+00> : vector<16x128xf32>
    %11 = tpu.matmul %9, %10, %cst_10 {dimension_numbers = #tpu.dot_dimension_numbers<[1], [0], [0], [1], [0, 0, 1, 1], [], []>} : vector<16x128xbf16>, vector<128x128xbf16>, vector<16x128xf32> -> vector<16x128xf32>
    %c0_11 = arith.constant 0 : index
    %c0_12 = arith.constant 0 : index
    %12 = vector.load %arg5[%c0_11, %c0_12] : memref<1x128xf32, #tpu.memory_space<vmem>>, vector<1x128xf32>
    %13 = vector.broadcast %12 : vector<1x128xf32> to vector<16x128xf32>
    %14 = arith.addf %11, %13 : vector<16x128xf32>
    %c0_13 = arith.constant 0 : index
    %c0_14 = arith.constant 0 : index
    %15 = vector.load %arg6[%c0_13, %c0_14] : memref<16x128xf32, #tpu.memory_space<vmem>>, vector<16x128xf32>
    tpu.vector_store %arg6[%c0_13, %c0_14], %14 {strides = array<i32>} : memref<16x128xf32, #tpu.memory_space<vmem>>, vector<16x128xf32>,
    return
  }
  func.func @transform_0(%arg0: i32) -> (i32, i32) {
    %c0_i32 = arith.constant 0 : i32
    %c0_i32_0 = arith.constant 0 : i32
    return %arg0, %c0_i32 : i32, i32
  }
  func.func @transform_1(%arg0: i32) -> (i32, i32) {
    %c0_i32 = arith.constant 0 : i32
    %c0_i32_0 = arith.constant 0 : i32
    %c0_i32_1 = arith.constant 0 : i32
    return %c0_i32, %c0_i32_0 : i32, i32
  }
  func.func @transform_2(%arg0: i32) -> (i32, i32) {
    %c0_i32 = arith.constant 0 : i32
    %c0_i32_0 = arith.constant 0 : i32
    %c0_i32_1 = arith.constant 0 : i32
    return %c0_i32, %c0_i32_0 : i32, i32
  }
  func.func @transform_3(%arg0: i32) -> (i32, i32) {
    %c0_i32 = arith.constant 0 : i32
    %c0_i32_0 = arith.constant 0 : i32
    %c0_i32_1 = arith.constant 0 : i32
    return %c0_i32, %c0_i32_0 : i32, i32
  }
  func.func @transform_4(%arg0: i32) -> (i32, i32) {
    %c0_i32 = arith.constant 0 : i32
    %c0_i32_0 = arith.constant 0 : i32
    %c0_i32_1 = arith.constant 0 : i32
    return %c0_i32, %c0_i32_0 : i32, i32
  }
  func.func @transform_5(%arg0: i32) -> (i32, i32) {
    %c0_i32 = arith.constant 0 : i32
    %c0_i32_0 = arith.constant 0 : i32
    return %arg0, %c0_i32 : i32, i32
  }
  func.func @transform_6(%arg0: i32) -> (i32, i32) {
    %c0_i32 = arith.constant 0 : i32
    %c0_i32_0 = arith.constant 0 : i32
    return %arg0, %c0_i32 : i32, i32
  }
}

</mosaic_0001>

<llo_original>
// kernel: tpu_custom_call.1
$region0: #{tpu_custom_call.1}
  #allocation0 [shape = 'u32[]', space=smem, size = 0x4, offset = 0x4, fixed_abs, tag = 'smem constant byte address 0x4 - core index']
  #allocation1 [shape = 'u32[144,128]{1,0:T(1,128)}', space=vmem, size = 0x12000, scoped, tag = 'internal scratch']
  %s0 = inlined_call_operand.hbm [shape: bf16[16,128], index: 0, kind: input, shape index: {}]
  %s1 = inlined_call_operand.hbm [shape: bf16[128,128], index: 1, kind: input, shape index: {}]
  %s2 = inlined_call_operand.vmem [shape: f32[1,128], index: 2, kind: input, shape index: {}]
  %s3 = inlined_call_operand.hbm [shape: bf16[128,128], index: 3, kind: input, shape index: {}]
  %s4 = inlined_call_operand.vmem [shape: f32[1,128], index: 4, kind: input, shape index: {}]
  %s5 = inlined_call_operand.hbm [shape: f32[16,128], index: 5, kind: output, shape index: {0}]
  %s6 = inlined_call_operand.hbm [shape: f32[16,128], index: 6, kind: output, shape index: {1}]
  %7 = xla_tuple %s5, %s6
  %s8 = sld [smem:[#allocation0]]
  $region50: #{tpu_custom_call.1} parent=0
    _
  %s10 = ssub.s32 1, %s8
  %s11 = scalar_select 0, %s10, %s8
  $region1: #{tpu_custom_call.1} parent=0
    #allocation2 [shape = 'u8[4096]{0}', space=vmem, size = 0x1000, scoped, tag = 'input window, operand 0, single buffered']
    #allocation3 [shape = 's32[1]{0}', space=sflag, size = 0x4, scoped, tag = 'scoped memory for tpu_custom_call.1']
    #allocation4 [shape = 's32[1]{0}', space=sflag, size = 0x4, scoped, tag = 'scoped memory for tpu_custom_call.1']
    #allocation5 [shape = 'u8[32768]{0}', space=vmem, size = 0x8000, scoped, tag = 'input window, operand 1, single buffered']
    #allocation6 [shape = 's32[1]{0}', space=sflag, size = 0x4, scoped, tag = 'scoped memory for tpu_custom_call.1']
    #allocation7 [shape = 'u8[32768]{0}', space=vmem, size = 0x8000, scoped, tag = 'input window, operand 3, single buffered']
    #allocation8 [shape = 'u8[8192]{0}', space=vmem, size = 0x2000, scoped, tag = 'output window, operand 0, single buffered']
    #allocation9 [shape = 'u8[8192]{0}', space=vmem, size = 0x2000, scoped, tag = 'output window, operand 1, single buffered']
    #allocation10 [shape = 's32[1]{0}', space=sflag, size = 0x4, scoped, tag = 'scoped memory for tpu_custom_call.1']
    %12 = vsyncpa [#allocation3], 0
    %13 = vsyncpa [#allocation6], 0
    %14 = vsyncpa [#allocation4], 0
    %15 = vsyncpa [#allocation10], 0
    // Predicated region
    $region2: #{tpu_custom_call.1} parent=1 // pred_check
      _
    $region3: #{tpu_custom_call.1} parent=1 // pred_check_branch
      %17 = sbr.rel (0) target = $region5
    $region4: #{tpu_custom_call.1} parent=1 // pred_region
      %s19 = ssub.s32 128, 128
      %20 = vsyncadd [#allocation3], %s19
      %s21 = sshll.u32 [#allocation2], 4
      %s22 = int_to_ptr.vmem [resolvable:$true] %s21
      %27 = dma.hbm_to_vmem [thread:$0]  %s0, 128, %s22, [#allocation3], 64, 64, 4
    $region5: #{tpu_custom_call.1} parent=1 // pred_fallthru
      _
    // Predicated region
    $region6: #{tpu_custom_call.1} parent=1 // pred_check
      _
    $region7: #{tpu_custom_call.1} parent=1 // pred_check_branch
      %29 = sbr.rel (0) target = $region9
    $region8: #{tpu_custom_call.1} parent=1 // pred_region
      %s31 = ssub.s32 1024, 1024
      %32 = vsyncadd [#allocation6], %s31
      %s33 = sshll.u32 [#allocation5], 4
      %s34 = int_to_ptr.vmem [resolvable:$true] %s33
      %39 = dma.hbm_to_vmem [thread:$0]  %s1, 1024, %s34, [#allocation6], 64, 64, 4
    $region9: #{tpu_custom_call.1} parent=1 // pred_fallthru
      _
    // Predicated region
    $region10: #{tpu_custom_call.1} parent=1 // pred_check
      _
    $region11: #{tpu_custom_call.1} parent=1 // pred_check_branch
      %41 = sbr.rel (0) target = $region13
    $region12: #{tpu_custom_call.1} parent=1 // pred_region
      _
    $region13: #{tpu_custom_call.1} parent=1 // pred_fallthru
      _
    // Predicated region
    $region14: #{tpu_custom_call.1} parent=1 // pred_check
      _
    $region15: #{tpu_custom_call.1} parent=1 // pred_check_branch
      %43 = sbr.rel (0) target = $region17
    $region16: #{tpu_custom_call.1} parent=1 // pred_region
      %s45 = ssub.s32 1024, 1024
      %46 = vsyncadd [#allocation6], %s45
      %s47 = sshll.u32 [#allocation7], 4
      %s48 = int_to_ptr.vmem [resolvable:$true] %s47
      %53 = dma.hbm_to_vmem [thread:$0]  %s3, 1024, %s48, [#allocation6], 64, 64, 4
    $region17: #{tpu_custom_call.1} parent=1 // pred_fallthru
      _
    // Predicated region
    $region18: #{tpu_custom_call.1} parent=1 // pred_check
      _
    $region19: #{tpu_custom_call.1} parent=1 // pred_check_branch
      %55 = sbr.rel (0) target = $region21
    $region20: #{tpu_custom_call.1} parent=1 // pred_region
      _
    $region21: #{tpu_custom_call.1} parent=1 // pred_fallthru
      _
    // Predicated region
    $region22: #{tpu_custom_call.1} parent=1 // pred_check
      _
    $region23: #{tpu_custom_call.1} parent=1 // pred_check_branch
      %57 = sbr.rel (0) target = $region25
    $region24: #{tpu_custom_call.1} parent=1 // pred_region
      %58 = dma.done [#allocation3], 128
    $region25: #{tpu_custom_call.1} parent=1 // pred_fallthru
      _
    // Predicated region
    $region26: #{tpu_custom_call.1} parent=1 // pred_check
      _
    $region27: #{tpu_custom_call.1} parent=1 // pred_check_branch
      %60 = sbr.rel (0) target = $region29
    $region28: #{tpu_custom_call.1} parent=1 // pred_region
      %61 = dma.done [#allocation6], 1024
    $region29: #{tpu_custom_call.1} parent=1 // pred_fallthru
      _
    // Predicated region
    $region30: #{tpu_custom_call.1} parent=1 // pred_check
      _
    $region31: #{tpu_custom_call.1} parent=1 // pred_check_branch
      %63 = sbr.rel (0) target = $region33
    $region32: #{tpu_custom_call.1} parent=1 // pred_region
      %64 = dma.done [#allocation6], 1024
    $region33: #{tpu_custom_call.1} parent=1 // pred_fallthru
      _
    %v66 = vld [vmem:[#allocation2] sm:$0xf]
    %v67 = vld [vmem:[#allocation2 + $0x4] sm:$0xf]
    %v68 = vld [vmem:[#allocation5] sm:$0xf]
    %v69 = vld [vmem:[#allocation5 + $0x4] sm:$0xf]
    %v70 = vld [vmem:[#allocation5 + $0x8] sm:$0xf]
    %v71 = vld [vmem:[#allocation5 + $0xc] sm:$0xf]
    %v72 = vld [vmem:[#allocation5 + $0x10] sm:$0xf]
    %v73 = vld [vmem:[#allocation5 + $0x14] sm:$0xf]
    %v74 = vld [vmem:[#allocation5 + $0x18] sm:$0xf]
    %v75 = vld [vmem:[#allocation5 + $0x1c] sm:$0xf]
    %v76 = vld [vmem:[#allocation5 + $0x20] sm:$0xf]
    %v77 = vld [vmem:[#allocation5 + $0x24] sm:$0xf]
    %v78 = vld [vmem:[#allocation5 + $0x28] sm:$0xf]
    %v79 = vld [vmem:[#allocation5 + $0x2c] sm:$0xf]
    %v80 = vld [vmem:[#allocation5 + $0x30] sm:$0xf]
    %v81 = vld [vmem:[#allocation5 + $0x34] sm:$0xf]
    %v82 = vld [vmem:[#allocation5 + $0x38] sm:$0xf]
    %v83 = vld [vmem:[#allocation5 + $0x3c] sm:$0xf]
    %v84 = vld [vmem:[%s2] sm:$0x1]
    %v86 = vlaneseq
    %v87 = vshrl.u32 %v86, 7
    %v88 = vsub.s32 0, %v87
    %v89 = vrot.slane %v84, %v88
    %v93 = vunpack.c.l.b16 %v66
    %v94 = vunpack.c.l.b16 %v67
    %v95 = vpack.c.b16 %v94, %v93
    %v113 = vunpack.c.l.b16 %v68
    %v114 = vunpack.c.l.b16 %v69
    %v115 = vunpack.c.l.b16 %v70
    %v116 = vunpack.c.l.b16 %v71
    %v117 = vunpack.c.l.b16 %v72
    %v118 = vunpack.c.l.b16 %v73
    %v119 = vunpack.c.l.b16 %v74
    %v120 = vunpack.c.l.b16 %v75
    %v121 = vunpack.c.l.b16 %v76
    %v122 = vunpack.c.l.b16 %v77
    %v123 = vunpack.c.l.b16 %v78
    %v124 = vunpack.c.l.b16 %v79
    %v125 = vunpack.c.l.b16 %v80
    %v126 = vunpack.c.l.b16 %v81
    %v127 = vunpack.c.l.b16 %v82
    %v128 = vunpack.c.l.b16 %v83
    %v129 = vpack.c.b16 %v114, %v113
    %v130 = vpack.c.b16 %v116, %v115
    %v131 = vpack.c.b16 %v118, %v117
    %v132 = vpack.c.b16 %v120, %v119
    %v133 = vpack.c.b16 %v122, %v121
    %v134 = vpack.c.b16 %v124, %v123
    %v135 = vpack.c.b16 %v126, %v125
    %v136 = vpack.c.b16 %v128, %v127
    %145 = vmatprep.subr.bf16.mxu0 0
    %146 = vmatpush1.bf16.msra.mxu0 %v129
    %147 = vmatprep.subr.bf16.mxu0 0
    %148 = vmatpush1.bf16.msra.mxu0 %v130
    %149 = vmatprep.subr.bf16.mxu0 0
    %150 = vmatpush1.bf16.msra.mxu0 %v131
    %151 = vmatprep.subr.bf16.mxu0 0
    %152 = vmatpush1.bf16.msra.mxu0 %v132
    %153 = vmatprep.subr.bf16.mxu0 0
    %154 = vmatpush1.bf16.msra.mxu0 %v133
    %155 = vmatprep.subr.bf16.mxu0 0
    %156 = vmatpush1.bf16.msra.mxu0 %v134
    %157 = vmatprep.subr.bf16.mxu0 0
    %158 = vmatpush1.bf16.msra.mxu0 %v135
    %159 = vmatprep.subr.bf16.mxu0 0
    %160 = vmatpush1.bf16.msra.mxu0 %v136
    %161 = vmatprep.subr.bf16.mxu0 0
    %162 = vmatpush1.bf16.msra.mxu0 0
    %163 = vmatprep.subr.bf16.mxu0 0
    %164 = vmatpush1.bf16.msra.mxu0 0
    %165 = vmatprep.subr.bf16.mxu0 0
    %166 = vmatpush1.bf16.msra.mxu0 0
    %167 = vmatprep.subr.bf16.mxu0 0
    %168 = vmatpush1.bf16.msra.mxu0 0
    %169 = vmatprep.subr.bf16.mxu0 0
    %170 = vmatpush1.bf16.msra.mxu0 0
    %171 = vmatprep.subr.bf16.mxu0 0
    %172 = vmatpush1.bf16.msra.mxu0 0
    %173 = vmatprep.subr.bf16.mxu0 0
    %174 = vmatpush1.bf16.msra.mxu0 0
    %175 = vmatprep.subr.bf16.mxu0 0
    %176 = vmatpush1.bf16.msra.mxu0 0
    %177 = vmatprep.mubr.bf16.mxu0 0
    %178 = vmatmul.mubr.bf16.gmra.mrb[0].mxu0 %v95
    %v179 = vpop.f32.mrb[0].mxu0
    %v180 = vadd.f32 %v89, %v179
    %v181 = vpop.f32.mrb[0].mxu0
    %v182 = vpop.f32.mrb[0].mxu0
    %v183 = vadd.f32 %v89, %v182
    %v184 = vpop.f32.mrb[0].mxu0
    %185 = vdwg.mxu0
    %v186 = vmax.f32 %v180, 0.0
    %v187 = vmax.f32 %v183, 0.0
    %188 = vst [vmem:[#allocation9] sm:$0xff] %v186
    %189 = vst [vmem:[#allocation9 + $0x8] sm:$0xff] %v187
    %v190 = vpack.c.bf16 %v187, %v186
    %v191 = vld [vmem:[#allocation7] sm:$0xf]
    %v192 = vld [vmem:[#allocation7 + $0x4] sm:$0xf]
    %v193 = vld [vmem:[#allocation7 + $0x8] sm:$0xf]
    %v194 = vld [vmem:[#allocation7 + $0xc] sm:$0xf]
    %v195 = vld [vmem:[#allocation7 + $0x10] sm:$0xf]
    %v196 = vld [vmem:[#allocation7 + $0x14] sm:$0xf]
    %v197 = vld [vmem:[#allocation7 + $0x18] sm:$0xf]
    %v198 = vld [vmem:[#allocation7 + $0x1c] sm:$0xf]
    %v199 = vld [vmem:[#allocation7 + $0x20] sm:$0xf]
    %v200 = vld [vmem:[#allocation7 + $0x24] sm:$0xf]
    %v201 = vld [vmem:[#allocation7 + $0x28] sm:$0xf]
    %v202 = vld [vmem:[#allocation7 + $0x2c] sm:$0xf]
    %v203 = vld [vmem:[#allocation7 + $0x30] sm:$0xf]
    %v204 = vld [vmem:[#allocation7 + $0x34] sm:$0xf]
    %v205 = vld [vmem:[#allocation7 + $0x38] sm:$0xf]
    %v206 = vld [vmem:[#allocation7 + $0x3c] sm:$0xf]
    %v207 = vld [vmem:[%s4] sm:$0x1]
    %v209 = vlaneseq
    %v210 = vshrl.u32 %v209, 7
    %v211 = vsub.s32 0, %v210
    %v212 = vrot.slane %v207, %v211
    %v230 = vunpack.c.l.b16 %v191
    %v231 = vunpack.c.l.b16 %v192
    %v232 = vunpack.c.l.b16 %v193
    %v233 = vunpack.c.l.b16 %v194
    %v234 = vunpack.c.l.b16 %v195
    %v235 = vunpack.c.l.b16 %v196
    %v236 = vunpack.c.l.b16 %v197
    %v237 = vunpack.c.l.b16 %v198
    %v238 = vunpack.c.l.b16 %v199
    %v239 = vunpack.c.l.b16 %v200
    %v240 = vunpack.c.l.b16 %v201
    %v241 = vunpack.c.l.b16 %v202
    %v242 = vunpack.c.l.b16 %v203
    %v243 = vunpack.c.l.b16 %v204
    %v244 = vunpack.c.l.b16 %v205
    %v245 = vunpack.c.l.b16 %v206
    %v246 = vpack.c.b16 %v231, %v230
    %v247 = vpack.c.b16 %v233, %v232
    %v248 = vpack.c.b16 %v235, %v234
    %v249 = vpack.c.b16 %v237, %v236
    %v250 = vpack.c.b16 %v239, %v238
    %v251 = vpack.c.b16 %v241, %v240
    %v252 = vpack.c.b16 %v243, %v242
    %v253 = vpack.c.b16 %v245, %v244
    %262 = vmatprep.subr.bf16.mxu0 0
    %263 = vmatpush1.bf16.msra.mxu0 %v246
    %264 = vmatprep.subr.bf16.mxu0 0
    %265 = vmatpush1.bf16.msra.mxu0 %v247
    %266 = vmatprep.subr.bf16.mxu0 0
    %267 = vmatpush1.bf16.msra.mxu0 %v248
    %268 = vmatprep.subr.bf16.mxu0 0
    %269 = vmatpush1.bf16.msra.mxu0 %v249
    %270 = vmatprep.subr.bf16.mxu0 0
    %271 = vmatpush1.bf16.msra.mxu0 %v250
    %272 = vmatprep.subr.bf16.mxu0 0
    %273 = vmatpush1.bf16.msra.mxu0 %v251
    %274 = vmatprep.subr.bf16.mxu0 0
    %275 = vmatpush1.bf16.msra.mxu0 %v252
    %276 = vmatprep.subr.bf16.mxu0 0
    %277 = vmatpush1.bf16.msra.mxu0 %v253
    %278 = vmatprep.subr.bf16.mxu0 0
    %279 = vmatpush1.bf16.msra.mxu0 0
    %280 = vmatprep.subr.bf16.mxu0 0
    %281 = vmatpush1.bf16.msra.mxu0 0
    %282 = vmatprep.subr.bf16.mxu0 0
    %283 = vmatpush1.bf16.msra.mxu0 0
    %284 = vmatprep.subr.bf16.mxu0 0
    %285 = vmatpush1.bf16.msra.mxu0 0
    %286 = vmatprep.subr.bf16.mxu0 0
    %287 = vmatpush1.bf16.msra.mxu0 0
    %288 = vmatprep.subr.bf16.mxu0 0
    %289 = vmatpush1.bf16.msra.mxu0 0
    %290 = vmatprep.subr.bf16.mxu0 0
    %291 = vmatpush1.bf16.msra.mxu0 0
    %292 = vmatprep.subr.bf16.mxu0 0
    %293 = vmatpush1.bf16.msra.mxu0 0
    %294 = vmatprep.mubr.bf16.mxu0 0
    %295 = vmatmul.mubr.bf16.gmra.mrb[0].mxu0 %v190
    %v296 = vpop.f32.mrb[0].mxu0
    %v297 = vadd.f32 %v212, %v296
    %v298 = vpop.f32.mrb[0].mxu0
    %v299 = vpop.f32.mrb[0].mxu0
    %v300 = vadd.f32 %v212, %v299
    %v301 = vpop.f32.mrb[0].mxu0
    %302 = vdwg.mxu0
    %303 = vst [vmem:[#allocation8] sm:$0xff] %v297
    %304 = vst [vmem:[#allocation8 + $0x8] sm:$0xff] %v300
    // Predicated region
    $region34: #{tpu_custom_call.1} parent=1 // pred_check
      _
    $region35: #{tpu_custom_call.1} parent=1 // pred_check_branch
      %306 = sbr.rel (0) target = $region37
    $region36: #{tpu_custom_call.1} parent=1 // pred_region
      %s308 = ssub.s32 256, 256
      %309 = vsyncadd [#allocation4], %s308
      %s310 = sshll.u32 [#allocation8], 4
      %s311 = int_to_ptr.vmem [resolvable:$true] %s310
      %316 = dma.vmem_to_hbm [thread:$0]  %s311, 256, %s5, [#allocation4], 128, 128, 8
    $region37: #{tpu_custom_call.1} parent=1 // pred_fallthru
      _
    // Predicated region
    $region38: #{tpu_custom_call.1} parent=1 // pred_check
      _
    $region39: #{tpu_custom_call.1} parent=1 // pred_check_branch
      %318 = sbr.rel (0) target = $region41
    $region40: #{tpu_custom_call.1} parent=1 // pred_region
      %s320 = ssub.s32 256, 256
      %321 = vsyncadd [#allocation10], %s320
      %s322 = sshll.u32 [#allocation9], 4
      %s323 = int_to_ptr.vmem [resolvable:$true] %s322
      %328 = dma.vmem_to_hbm [thread:$0]  %s323, 256, %s6, [#allocation10], 128, 128, 8
    $region41: #{tpu_custom_call.1} parent=1 // pred_fallthru
      _
    // Predicated region
    $region42: #{tpu_custom_call.1} parent=1 // pred_check
      _
    $region43: #{tpu_custom_call.1} parent=1 // pred_check_branch
      %330 = sbr.rel (0) target = $region45
    $region44: #{tpu_custom_call.1} parent=1 // pred_region
      %331 = dma.done [#allocation4], 256
    $region45: #{tpu_custom_call.1} parent=1 // pred_fallthru
      _
    // Predicated region
    $region46: #{tpu_custom_call.1} parent=1 // pred_check
      _
    $region47: #{tpu_custom_call.1} parent=1 // pred_check_branch
      %333 = sbr.rel (0) target = $region49
    $region48: #{tpu_custom_call.1} parent=1 // pred_region
      %334 = dma.done [#allocation10], 256
    $region49: #{tpu_custom_call.1} parent=1 // pred_fallthru
      _
    %335 = vsyncpa [#allocation3], 1
    %336 = vsyncpa [#allocation6], 1
    %337 = vsyncpa [#allocation4], 1
    %338 = vsyncpa [#allocation10], 1

</llo_original>
